<compile_context>
chip_gen: v7x
topology: tpu7x:2x2x1
jax: 0.10.0
libtpu: 0.0.40
codegen_flags: <defaults>
</compile_context>

<pallas_src>
import jax
import jax.numpy as jnp
from jax.experimental import pallas as pl
from jax.experimental.pallas import tpu as pltpu


def _round_up(x, m):
    return ((x + m - 1) // m) * m


def _matmul_bias_kernel(x_ref, w_ref, b_ref, o_ref, acc_ref):
    # x_ref:   (TILE_M, TILE_D)   input tile (normalization already folded into W/b)
    # w_ref:   (TILE_D, K_PAD)    folded classifier weights
    # b_ref:   (1, K_PAD)         folded bias
    # o_ref:   (TILE_M, K_PAD)    logits tile
    # acc_ref: (TILE_M, K_PAD)    f32 VMEM accumulator, resident across the D axis
    k = pl.program_id(1)

    @pl.when(k == 0)
    def _():
        acc_ref[...] = jnp.zeros_like(acc_ref)

    acc_ref[...] += jnp.dot(x_ref[...], w_ref[...],
                            preferred_element_type=jnp.float32)

    @pl.when(k == pl.num_programs(1) - 1)
    def _():
        o_ref[...] = (acc_ref[...] + b_ref[...]).astype(o_ref.dtype)


def norm_classifier_forward(x_nchw, mean, std, w, b, *, tile_m=128, tile_d=256):
    """x_nchw: (N, 3, H, W) f32.  mean/std: length-3.  w: (3*H*W, K).  b: (K,)."""
    n, c, h, w_sp = x_nchw.shape
    d = c * h * w_sp
    k = w.shape[1]

    # ---- wrapper glue (runs once per call, amortized) --------------------------------
    # Per-feature stats (channel stats broadcast over H*W, matching NCHW row-major flatten).
    hw = h * w_sp
    mean_vec = jnp.repeat(mean.astype(jnp.float32), hw)           # (D,)
    stdinv_vec = jnp.repeat((1.0 / std).astype(jnp.float32), hw)  # (D,)

    # Fold normalization into the classifier:
    #   (x - mean) * stdinv @ W + b == x @ (stdinv[:,None] * W) + (b - (mean*stdinv) @ W)
    w_folded = w.astype(jnp.float32) * stdinv_vec[:, None]                       # (D, K)
    b_folded = b.astype(jnp.float32) - (mean_vec * stdinv_vec) @ w.astype(jnp.float32)

    # Pad K to a lane-dense multiple of 128 and D/N to tile multiples (zero-padding
    # is exact: padded rows/cols contribute nothing, output is sliced back).
    k_pad = _round_up(k, 128)
    tile_m = tile_m if n >= tile_m else _round_up(n, 8)
    d_pad = _round_up(d, tile_d)
    n_pad = _round_up(n, tile_m)

    x_flat = x_nchw.reshape(n, d).astype(jnp.float32)
    x_p = jnp.zeros((n_pad, d_pad), jnp.float32).at[:n, :d].set(x_flat)
    w_p = jnp.zeros((d_pad, k_pad), jnp.float32).at[:d, :k].set(w_folded)
    b_p = jnp.zeros((1, k_pad), jnp.float32).at[0, :k].set(b_folded)

    grid = (n_pad // tile_m, d_pad // tile_d)

    out = pl.pallas_call(
        _matmul_bias_kernel,
        out_shape=jax.ShapeDtypeStruct((n_pad, k_pad), jnp.float32),
        grid_spec=pltpu.PrefetchScalarGridSpec(
            num_scalar_prefetch=0,
            grid=grid,
            in_specs=[
                pl.BlockSpec((tile_m, tile_d), lambda i, kk: (i, kk)),   # x tile
                pl.BlockSpec((tile_d, k_pad), lambda i, kk: (kk, 0)),    # W tile
                pl.BlockSpec((1, k_pad), lambda i, kk: (0, 0)),          # bias
            ],
            out_specs=pl.BlockSpec((tile_m, k_pad), lambda i, kk: (i, 0)),
            scratch_shapes=[pltpu.VMEM((tile_m, k_pad), jnp.float32)],
        ),
        compiler_params=pltpu.CompilerParams(
            dimension_semantics=("parallel", "arbitrary"),
            vmem_limit_bytes=32 << 20,
        ),
        cost_estimate=pl.CostEstimate(
            flops=2 * n_pad * d_pad * k_pad,
            transcendentals=0,
            bytes_accessed=4 * (n_pad * d_pad + d_pad * k_pad + n_pad * k_pad),
        ),
    )(x_p, w_p, b_p)

    # TODO(synk): for v6e/v7x throughput, optionally cast x_p/w_p to bf16 (keep f32 acc).
    return out[:n, :k]


if __name__ == "__main__":
    # Small deterministic setup: N=2, C=3 (normalize hardcodes 3 channels), H=W=16.
    N, C, H, W = 2, 3, 16, 16
    D = C * H * W
    NUM_CLASSES = 10

    key = jax.random.PRNGKey(0)
    kx, kw, kb = jax.random.split(key, 3)

    x = jax.random.normal(kx, (N, C, H, W), dtype=jnp.float32)

    # CIFAR-style normalization constants (deterministic).
    mean = jnp.array([0.4914, 0.4822, 0.4465], dtype=jnp.float32)
    std = jnp.array([0.2471, 0.2435, 0.2616], dtype=jnp.float32)

    # Deterministic linear-classifier parameters (Kaiming-uniform-ish scale).
    bound = 1.0 / jnp.sqrt(jnp.float32(D))
    w = jax.random.uniform(kw, (D, NUM_CLASSES), jnp.float32, -bound, bound)
    b = jax.random.uniform(kb, (NUM_CLASSES,), jnp.float32, -bound, bound)

    out = norm_classifier_forward(x, mean, std, w, b)
    out = jax.block_until_ready(out)

    # Plain-JAX reference check of the normalize + linear semantics.
    xn_ref = (x - mean[None, :, None, None]) / std[None, :, None, None]
    ref = xn_ref.reshape(N, D) @ w + b[None, :]
    assert out.shape == (N, NUM_CLASSES)
    assert jnp.allclose(out, ref, atol=1e-3, rtol=1e-3)

    print("KERNEL_OK")
</pallas_src>

<mosaic_0001>
module attributes {stable_mosaic.version = 11 : i64} {
  func.func @_matmul_bias_kernel(%arg0: i32, %arg1: i32, %arg2: memref<8x256xf32, #tpu.memory_space<vmem>>, %arg3: memref<256x128xf32, #tpu.memory_space<vmem>>, %arg4: memref<1x128xf32, #tpu.memory_space<vmem>>, %arg5: memref<8x128xf32, #tpu.memory_space<vmem>>, %arg6: memref<8x128xf32, #tpu.memory_space<vmem>>) attributes {dimension_semantics = [#tpu.dimension_semantics<parallel>, #tpu.dimension_semantics<arbitrary>], iteration_bounds = array<i64: 1, 3>, scalar_prefetch = 0 : i64, scratch_operands = 1 : i64, tpu.core_type = #tpu.core_type<tc>, window_params = [{transform_indices = @transform_0, window_bounds = array<i64: 8, 256>}, {transform_indices = @transform_1, window_bounds = array<i64: 256, 128>}, {pipeline_mode = #tpu.pipeline_mode<synchronous>, transform_indices = @transform_2, window_bounds = array<i64: 1, 128>}, {transform_indices = @transform_3, window_bounds = array<i64: 8, 128>}]} {
    %c0_i32 = arith.constant 0 : i32
    %0 = arith.cmpi eq, %arg1, %c0_i32 : i32
    %1 = arith.extui %0 : i1 to i32
    %c0_i32_0 = arith.constant 0 : i32
    %2 = arith.cmpi ne, %1, %c0_i32_0 : i32
    scf.if %2 {
      %cst_9 = arith.constant 0.000000e+00 : f32
      %12 = vector.broadcast %cst_9 : f32 to vector<8x128xf32>
      %c0_10 = arith.constant 0 : index
      %c0_11 = arith.constant 0 : index
      %13 = vector.load %arg6[%c0_10, %c0_11] : memref<8x128xf32, #tpu.memory_space<vmem>>, vector<8x128xf32>
      tpu.vector_store %arg6[%c0_10, %c0_11], %12 {strides = array<i32>} : memref<8x128xf32, #tpu.memory_space<vmem>>, vector<8x128xf32>,
    } else {
    }
    %c0 = arith.constant 0 : index
    %c0_1 = arith.constant 0 : index
    %3 = vector.load %arg6[%c0, %c0_1] : memref<8x128xf32, #tpu.memory_space<vmem>>, vector<8x128xf32>
    %c0_2 = arith.constant 0 : index
    %c0_3 = arith.constant 0 : index
    %4 = vector.load %arg2[%c0_2, %c0_3] : memref<8x256xf32, #tpu.memory_space<vmem>>, vector<8x256xf32>
    %c0_4 = arith.constant 0 : index
    %c0_5 = arith.constant 0 : index
    %5 = vector.load %arg3[%c0_4, %c0_5] : memref<256x128xf32, #tpu.memory_space<vmem>>, vector<256x128xf32>
    %cst = arith.constant dense<0.000000e+00> : vector<8x128xf32>
    %6 = tpu.matmul %4, %5, %cst {dimension_numbers = #tpu.dot_dimension_numbers<[1], [0], [0], [1], [0, 0, 1, 1], [], []>} : vector<8x256xf32>, vector<256x128xf32>, vector<8x128xf32> -> vector<8x128xf32>
    %7 = arith.addf %3, %6 : vector<8x128xf32>
    %c0_6 = arith.constant 0 : index
    %c0_7 = arith.constant 0 : index
    %8 = vector.load %arg6[%c0_6, %c0_7] : memref<8x128xf32, #tpu.memory_space<vmem>>, vector<8x128xf32>
    tpu.vector_store %arg6[%c0_6, %c0_7], %7 {strides = array<i32>} : memref<8x128xf32, #tpu.memory_space<vmem>>, vector<8x128xf32>,
    %c2_i32 = arith.constant 2 : i32
    %9 = arith.cmpi eq, %arg1, %c2_i32 : i32
    %10 = arith.extui %9 : i1 to i32
    %c0_i32_8 = arith.constant 0 : i32
    %11 = arith.cmpi ne, %10, %c0_i32_8 : i32
    scf.if %11 {
      %c0_9 = arith.constant 0 : index
      %c0_10 = arith.constant 0 : index
      %12 = vector.load %arg6[%c0_9, %c0_10] : memref<8x128xf32, #tpu.memory_space<vmem>>, vector<8x128xf32>
      %c0_11 = arith.constant 0 : index
      %c0_12 = arith.constant 0 : index
      %13 = vector.load %arg4[%c0_11, %c0_12] : memref<1x128xf32, #tpu.memory_space<vmem>>, vector<1x128xf32>
      %14 = vector.broadcast %13 : vector<1x128xf32> to vector<8x128xf32>
      %15 = arith.addf %12, %14 : vector<8x128xf32>
      %c0_13 = arith.constant 0 : index
      %c0_14 = arith.constant 0 : index
      %16 = vector.load %arg5[%c0_13, %c0_14] : memref<8x128xf32, #tpu.memory_space<vmem>>, vector<8x128xf32>
      tpu.vector_store %arg5[%c0_13, %c0_14], %15 {strides = array<i32>} : memref<8x128xf32, #tpu.memory_space<vmem>>, vector<8x128xf32>,
    } else {
    }
    return
  }
  func.func @transform_0(%arg0: i32, %arg1: i32) -> (i32, i32) {
    %c0_i32 = arith.constant 0 : i32
    return %arg0, %arg1 : i32, i32
  }
  func.func @transform_1(%arg0: i32, %arg1: i32) -> (i32, i32) {
    %c0_i32 = arith.constant 0 : i32
    %c0_i32_0 = arith.constant 0 : i32
    return %arg1, %c0_i32 : i32, i32
  }
  func.func @transform_2(%arg0: i32, %arg1: i32) -> (i32, i32) {
    %c0_i32 = arith.constant 0 : i32
    %c0_i32_0 = arith.constant 0 : i32
    %c0_i32_1 = arith.constant 0 : i32
    return %c0_i32, %c0_i32_0 : i32, i32
  }
  func.func @transform_3(%arg0: i32, %arg1: i32) -> (i32, i32) {
    %c0_i32 = arith.constant 0 : i32
    %c0_i32_0 = arith.constant 0 : i32
    return %arg0, %c0_i32 : i32, i32
  }
}

</mosaic_0001>

<llo_original>
// kernel: tpu_custom_call.1
$region0: #{tpu_custom_call.1}
  #allocation0 [shape = 'u32[]', space=smem, size = 0x4, offset = 0x4, fixed_abs, tag = 'smem constant byte address 0x4 - core index']
  #allocation1 [shape = 'u32[144,128]{1,0:T(1,128)}', space=vmem, size = 0x12000, scoped, tag = 'internal scratch']
  #allocation2 [shape = 'f32[8,128]{1,0:T(8,128)}', space=vmem, size = 0x1000, scoped, tag = 'scratch operand']
  %s0 = inlined_call_operand.hbm [shape: f32[8,768], index: 0, kind: input, shape index: {}]
  %s1 = inlined_call_operand.hbm [shape: f32[768,128], index: 1, kind: input, shape index: {}]
  %s2 = inlined_call_operand.vmem [shape: f32[1,128], index: 2, kind: input, shape index: {}]
  %s3 = inlined_call_operand.hbm [shape: f32[8,128], index: 3, kind: output, shape index: {}]
  %s4 = sld [smem:[#allocation0]]
  $region61: #{tpu_custom_call.1} parent=0
    _
  %s6 = ssub.s32 1, %s4
  %s7 = scalar_select 0, %s6, %s4
  $region1: #{tpu_custom_call.1} parent=0
    #allocation3 [shape = 'u8[16384]{0}', space=vmem, size = 0x4000, scoped, tag = 'input window, operand 0']
    #allocation4 [shape = 's32[2]{0}', space=sflag, size = 0x8, scoped, tag = 'scoped memory for tpu_custom_call.1']
    #allocation5 [shape = 's32[2]{0}', space=sflag, size = 0x8, scoped, tag = 'scoped memory for tpu_custom_call.1']
    #allocation6 [shape = 'u8[262144]{0}', space=vmem, size = 0x40000, scoped, tag = 'input window, operand 1']
    #allocation7 [shape = 's32[2]{0}', space=sflag, size = 0x8, scoped, tag = 'scoped memory for tpu_custom_call.1']
    #allocation8 [shape = 'u8[4096]{0}', space=vmem, size = 0x1000, scoped, tag = 'output window, operand 0, single buffered']
    %8 = vsyncpa [#allocation4], 0
    %s9 = scalar_lea.sflag [#allocation4], 1
    %10 = vsyncpa %s9, 0
    %11 = vsyncpa [#allocation7], 0
    %s12 = scalar_lea.sflag [#allocation7], 1
    %13 = vsyncpa %s12, 0
    %14 = vsyncpa [#allocation5], 0
    loop: start=0, step=1, limit=5
    $region2: #{tpu_custom_call.1} parent=1 // loop_pre_header
      _
    $region3: #{tpu_custom_call.1} parent=1 // loop_header
      %s16 = sphi 0, %s20
      %p17 = scmp.ge.s32.totalorder %s16, 5
      %s23 = sphi 0, %s35
      %s24 = sphi 0, %s31
      %s25 = sphi 0, %s23
      %s26 = sphi 0, %s24
      %s27 = sphi 0, %s25
      %s28 = sphi 0, %s26
      %s40 = sphi 0, %s42
      %s43 = sphi 0, %s40
      %s44 = sphi 0, %s43
      %s60 = sphi 0, %s44
      %s66 = sphi 0, %s68
      %s69 = sphi 0, %s66
      %s70 = sphi 0, %s69
      %s86 = sphi 0, %s70
      %s90 = sphi 0, %s90
      %s92 = sphi 0, %s90
      %s93 = sphi 0, %s92
      %s107 = sphi 0, %s93
      %s113 = sphi 0, %s115
      %s116 = sphi 0, %s113
      %s117 = sphi 0, %s116
      %s133 = sphi 0, %s117
    $region4: #{tpu_custom_call.1} parent=1 // loop_header_branch
      %19 = sbr.rel (%p17) target = $region8
    $region5: #{tpu_custom_call.1} parent=1 // loop_body
      %s21 = ssub.s32 %s16, 1
      %s22 = ssub.s32 %s16, 2
      %s29 = sadd.s32 1, %s24
      %p30 = scmp.ge.s32.totalorder %s29, 3
      %s31 = scalar_select %p30, 0, %s29
      %s32 = sadd.s32 1, %s23
      %s33 = scalar_select %p30, %s32, %s23
      %p34 = scmp.ge.s32.totalorder %s33, 1
      %s35 = scalar_select %p34, 0, %s33
      %s36 = ssub.s32 %s23, %s35
      %s37 = ssub.s32 %s24, %s31
      %s38 = sor.u32 %s36, %s37
      %p39 = scmp.eq.s32.totalorder %s38, 0
      %s41 = sadd.s32 %s40, 1
      %s42 = scalar_select %p39, %s40, %s41
      %p45 = pneg %p39
      %p46 = scmp.eq.s32.totalorder %s16, 2
      %p47 = por %p45, %p46
      %p48 = scmp.ne.s32.totalorder %s40, %s43
      %p49 = scmp.eq.s32.totalorder %s16, 0
      %p50 = por %p48, %p49
      %p51 = scmp.ne.s32.totalorder %s40, %s43
      %p52 = scmp.eq.s32.totalorder %s21, 2
      %p53 = por %p51, %p52
      %p54 = scmp.ne.s32.totalorder %s43, %s44
      %p55 = scmp.eq.s32.totalorder %s21, 0
      %p56 = por %p54, %p55
      %p57 = scmp.ne.s32.totalorder %s43, %s44
      %p58 = scmp.eq.s32.totalorder %s22, 2
      %p59 = por %p57, %p58
      %p61 = scmp.ne.s32.totalorder %s44, %s60
      %p62 = scmp.eq.s32.totalorder %s22, 0
      %p63 = por %p61, %p62
      %s64 = ssub.s32 %s24, %s31
      %p65 = scmp.eq.s32.totalorder %s64, 0
      %s67 = sadd.s32 %s66, 1
      %s68 = scalar_select %p65, %s66, %s67
      %p71 = pneg %p65
      %p72 = scmp.eq.s32.totalorder %s16, 2
      %p73 = por %p71, %p72
      %p74 = scmp.ne.s32.totalorder %s66, %s69
      %p75 = scmp.eq.s32.totalorder %s16, 0
      %p76 = por %p74, %p75
      %p77 = scmp.ne.s32.totalorder %s66, %s69
      %p78 = scmp.eq.s32.totalorder %s21, 2
      %p79 = por %p77, %p78
      %p80 = scmp.ne.s32.totalorder %s69, %s70
      %p81 = scmp.eq.s32.totalorder %s21, 0
      %p82 = por %p80, %p81
      %p83 = scmp.ne.s32.totalorder %s69, %s70
      %p84 = scmp.eq.s32.totalorder %s22, 2
      %p85 = por %p83, %p84
      %p87 = scmp.ne.s32.totalorder %s70, %s86
      %p88 = scmp.eq.s32.totalorder %s22, 0
      %p89 = por %p87, %p88
      %s91 = sadd.s32 %s90, 1
      %p94 = scmp.eq.s32.totalorder %s16, 2
      %p95 = scmp.ne.s32.totalorder %s90, %s92
      %p96 = scmp.eq.s32.totalorder %s16, 0
      %p97 = por %p95, %p96
      %p98 = scmp.ne.s32.totalorder %s90, %s92
      %p99 = scmp.eq.s32.totalorder %s21, 2
      %p100 = por %p98, %p99
      %p101 = scmp.ne.s32.totalorder %s92, %s93
      %p102 = scmp.eq.s32.totalorder %s21, 0
      %p103 = por %p101, %p102
      %p104 = scmp.ne.s32.totalorder %s92, %s93
      %p105 = scmp.eq.s32.totalorder %s22, 2
      %p106 = por %p104, %p105
      %p108 = scmp.ne.s32.totalorder %s93, %s107
      %p109 = scmp.eq.s32.totalorder %s22, 0
      %p110 = por %p108, %p109
      %s111 = ssub.s32 %s23, %s35
      %p112 = scmp.eq.s32.totalorder %s111, 0
      %s114 = sadd.s32 %s113, 1
      %s115 = scalar_select %p112, %s113, %s114
      %p118 = pneg %p112
      %p119 = scmp.eq.s32.totalorder %s16, 2
      %p120 = por %p118, %p119
      %p121 = scmp.ne.s32.totalorder %s113, %s116
      %p122 = scmp.eq.s32.totalorder %s16, 0
      %p123 = por %p121, %p122
      %p124 = scmp.ne.s32.totalorder %s113, %s116
      %p125 = scmp.eq.s32.totalorder %s21, 2
      %p126 = por %p124, %p125
      %p127 = scmp.ne.s32.totalorder %s116, %s117
      %p128 = scmp.eq.s32.totalorder %s21, 0
      %p129 = por %p127, %p128
      %p130 = scmp.ne.s32.totalorder %s116, %s117
      %p131 = scmp.eq.s32.totalorder %s22, 2
      %p132 = por %p130, %p131
      %p134 = scmp.ne.s32.totalorder %s117, %s133
      %p135 = scmp.eq.s32.totalorder %s22, 0
      %p136 = por %p134, %p135
      %p137 = scmp.le.s32.totalorder 1, %s16
      %p138 = scmp.lt.s32.totalorder %s16, 4
      %p139 = pnand %p137, %p138
      %p140 = pneg %p139
      // Predicated region
      $region9: #{tpu_custom_call.1} parent=5 // pred_check
        _
      $region10: #{tpu_custom_call.1} parent=5 // pred_check_branch
        %142 = sbr.rel (%p139) target = $region12
      $region11: #{tpu_custom_call.1} parent=5 // pred_region
        %s143 = ssub.s32 %s16, 1
        // Predicated region
        $region13: #{tpu_custom_call.1} parent=11 // pred_check
          %p144 = pneg %p103
        $region14: #{tpu_custom_call.1} parent=11 // pred_check_branch
          %146 = sbr.rel (%p144) target = $region16
        $region15: #{tpu_custom_call.1} parent=11 // pred_region
          _
        $region16: #{tpu_custom_call.1} parent=11 // pred_fallthru
          _
      $region12: #{tpu_custom_call.1} parent=5 // pred_fallthru
        _
      %p147 = scmp.lt.s32.totalorder %s16, 3
      // Predicated region
      $region17: #{tpu_custom_call.1} parent=5 // pred_check
        %p148 = pneg %p147
      $region18: #{tpu_custom_call.1} parent=5 // pred_check_branch
        %150 = sbr.rel (%p148) target = $region20
      $region19: #{tpu_custom_call.1} parent=5 // pred_region
        // Predicated region
        $region21: #{tpu_custom_call.1} parent=19 // pred_check
          %p151 = pneg %p50
        $region22: #{tpu_custom_call.1} parent=19 // pred_check_branch
          %153 = sbr.rel (%p151) target = $region24
        $region23: #{tpu_custom_call.1} parent=19 // pred_region
          %s154 = sand.u32 %s40, 1
          %s155 = scalar_lea.sflag [#allocation4], %s154
          %s156 = sand.u32 %s40, 1
          %s157 = smul.addr %s156, 16
          %s158 = scalar_lea.vmem [#allocation3], %s157
          %s159 = smul.u32 2, %s24
          %s161 = ssub.s32 256, 256
          %162 = vsyncadd %s155, %s161
          %s163 = smul.addr %s23, 6
          %s164 = sadd.s32 %s159, %s163
          %s165 = smul.addr %s164, 128
          %s166 = scalar_lea.hbm %s0, %s165
          %s168 = sshll.u32 %s158, 4
          %s169 = int_to_ptr.vmem [resolvable:$true] %s168
          %171 = dma.hbm_to_vmem [thread:$0]  %s166, 256, %s169, %s155
        $region24: #{tpu_custom_call.1} parent=19 // pred_fallthru
          _
        // Predicated region
        $region25: #{tpu_custom_call.1} parent=19 // pred_check
          %p172 = pneg %p76
        $region26: #{tpu_custom_call.1} parent=19 // pred_check_branch
          %174 = sbr.rel (%p172) target = $region28
        $region27: #{tpu_custom_call.1} parent=19 // pred_region
          %s175 = sand.u32 %s66, 1
          %s176 = scalar_lea.sflag [#allocation7], %s175
          %s177 = sand.u32 %s66, 1
          %s178 = smul.addr %s177, 256
          %s179 = scalar_lea.vmem [#allocation6], %s178
          %s180 = smul.u32 32, %s24
          %s182 = ssub.s32 4096, 4096
          %183 = vsyncadd %s176, %s182
          %s184 = smul.addr %s180, 128
          %s185 = scalar_lea.hbm %s1, %s184
          %s186 = sshll.u32 %s179, 4
          %s187 = int_to_ptr.vmem [resolvable:$true] %s186
          %192 = dma.hbm_to_vmem [thread:$0]  %s185, 4096, %s187, %s176, 128, 128, 8
        $region28: #{tpu_custom_call.1} parent=19 // pred_fallthru
          _
      $region20: #{tpu_custom_call.1} parent=5 // pred_fallthru
        _
      %p193 = scmp.le.s32.totalorder 1, %s16
      %p194 = scmp.lt.s32.totalorder %s16, 4
      %p195 = pnand %p193, %p194
      %p196 = pneg %p195
      // Predicated region
      $region29: #{tpu_custom_call.1} parent=5 // pred_check
        _
      $region30: #{tpu_custom_call.1} parent=5 // pred_check_branch
        %198 = sbr.rel (%p195) target = $region32
      $region31: #{tpu_custom_call.1} parent=5 // pred_region
        %s199 = ssub.s32 %s16, 1
        %s200 = sand.u32 %s43, 1
        %s201 = scalar_lea.sflag [#allocation4], %s200
        %s202 = sand.u32 %s43, 1
        %s203 = smul.addr %s202, 16
        %s204 = scalar_lea.vmem [#allocation3], %s203
        // Predicated region
        $region33: #{tpu_custom_call.1} parent=31 // pred_check
          %p205 = pneg %p56
        $region34: #{tpu_custom_call.1} parent=31 // pred_check_branch
          %207 = sbr.rel (%p205) target = $region36
        $region35: #{tpu_custom_call.1} parent=31 // pred_region
          %208 = dma.done %s201, 256
        $region36: #{tpu_custom_call.1} parent=31 // pred_fallthru
          _
        %s209 = sand.u32 %s69, 1
        %s210 = scalar_lea.sflag [#allocation7], %s209
        %s211 = sand.u32 %s69, 1
        %s212 = smul.addr %s211, 256
        %s213 = scalar_lea.vmem [#allocation6], %s212
        // Predicated region
        $region37: #{tpu_custom_call.1} parent=31 // pred_check
          %p214 = pneg %p82
        $region38: #{tpu_custom_call.1} parent=31 // pred_check_branch
          %216 = sbr.rel (%p214) target = $region40
        $region39: #{tpu_custom_call.1} parent=31 // pred_region
          %217 = dma.done %s210, 4096
        $region40: #{tpu_custom_call.1} parent=31 // pred_fallthru
          _
        %s218 = sand.u32 %s43, 1
        %s219 = scalar_lea.sflag [#allocation4], %s218
        %s220 = sand.u32 %s43, 1
        %s221 = smul.addr %s220, 16
        %s222 = scalar_lea.vmem [#allocation3], %s221
        %p223 = pneg %p56
        %p224 = pneg %p53
        %s225 = sand.u32 %s69, 1
        %s226 = scalar_lea.sflag [#allocation7], %s225
        %s227 = sand.u32 %s69, 1
        %s228 = smul.addr %s227, 256
        %s229 = scalar_lea.vmem [#allocation6], %s228
        %p230 = pneg %p82
        %p231 = pneg %p79
        %p232 = pneg %p103
        %p233 = pneg %p100
        %p234 = pneg %p129
        %p235 = pneg %p126
        %s236 = smul.u32 2, %s26
        %s237 = smul.u32 32, %s26
        %p238 = scmp.eq.s32.totalorder %s26, 0
        // Predicated region
        $region41: #{tpu_custom_call.1} parent=31 // pred_check
          %p239 = pneg %p238
        $region42: #{tpu_custom_call.1} parent=31 // pred_check_branch
          %241 = sbr.rel (%p239) target = $region44
        $region43: #{tpu_custom_call.1} parent=31 // pred_region
          %242 = vst [vmem:[#allocation2] sm:$0xff] 0.0
        $region44: #{tpu_custom_call.1} parent=31 // pred_fallthru
          _
        %v243 = vld [vmem:[#allocation2] sm:$0xff]
        %v244 = vld [vmem:[%s204] sm:$0xff]
        %v245 = vld [vmem:[%s204 + $0x8] sm:$0xff]
        %v246 = vld [vmem:[%s213] sm:$0xff]
        %v247 = vld [vmem:[%s213 + $0x8] sm:$0xff]
        %v248 = vld [vmem:[%s213 + $0x10] sm:$0xff]
        %v249 = vld [vmem:[%s213 + $0x18] sm:$0xff]
        %v250 = vld [vmem:[%s213 + $0x20] sm:$0xff]
        %v251 = vld [vmem:[%s213 + $0x28] sm:$0xff]
        %v252 = vld [vmem:[%s213 + $0x30] sm:$0xff]
        %v253 = vld [vmem:[%s213 + $0x38] sm:$0xff]
        %v254 = vld [vmem:[%s213 + $0x40] sm:$0xff]
        %v255 = vld [vmem:[%s213 + $0x48] sm:$0xff]
        %v256 = vld [vmem:[%s213 + $0x50] sm:$0xff]
        %v257 = vld [vmem:[%s213 + $0x58] sm:$0xff]
        %v258 = vld [vmem:[%s213 + $0x60] sm:$0xff]
        %v259 = vld [vmem:[%s213 + $0x68] sm:$0xff]
        %v260 = vld [vmem:[%s213 + $0x70] sm:$0xff]
        %v261 = vld [vmem:[%s213 + $0x78] sm:$0xff]
        %v262 = vld [vmem:[%s213 + $0x80] sm:$0xff]
        %v263 = vld [vmem:[%s213 + $0x88] sm:$0xff]
        %v264 = vld [vmem:[%s213 + $0x90] sm:$0xff]
        %v265 = vld [vmem:[%s213 + $0x98] sm:$0xff]
        %v266 = vld [vmem:[%s213 + $0xa0] sm:$0xff]
        %v267 = vld [vmem:[%s213 + $0xa8] sm:$0xff]
        %v268 = vld [vmem:[%s213 + $0xb0] sm:$0xff]
        %v269 = vld [vmem:[%s213 + $0xb8] sm:$0xff]
        %v270 = vld [vmem:[%s213 + $0xc0] sm:$0xff]
        %v271 = vld [vmem:[%s213 + $0xc8] sm:$0xff]
        %v272 = vld [vmem:[%s213 + $0xd0] sm:$0xff]
        %v273 = vld [vmem:[%s213 + $0xd8] sm:$0xff]
        %v274 = vld [vmem:[%s213 + $0xe0] sm:$0xff]
        %v275 = vld [vmem:[%s213 + $0xe8] sm:$0xff]
        %v276 = vld [vmem:[%s213 + $0xf0] sm:$0xff]
        %v277 = vld [vmem:[%s213 + $0xf8] sm:$0xff]
        %278 = vmatprep.subr.mxu0 0.0
        %279 = vmatpush1.msra.mxu0 %v246
        %280 = vmatprep.subr.mxu0 0.0
        %281 = vmatpush1.msra.mxu0 %v247
        %282 = vmatprep.subr.mxu0 0.0
        %283 = vmatpush1.msra.mxu0 %v248
        %284 = vmatprep.subr.mxu0 0.0
        %285 = vmatpush1.msra.mxu0 %v249
        %286 = vmatprep.subr.mxu0 0.0
        %287 = vmatpush1.msra.mxu0 %v250
        %288 = vmatprep.subr.mxu0 0.0
        %289 = vmatpush1.msra.mxu0 %v251
        %290 = vmatprep.subr.mxu0 0.0
        %291 = vmatpush1.msra.mxu0 %v252
        %292 = vmatprep.subr.mxu0 0.0
        %293 = vmatpush1.msra.mxu0 %v253
        %294 = vmatprep.subr.mxu0 0.0
        %295 = vmatpush1.msra.mxu0 %v254
        %296 = vmatprep.subr.mxu0 0.0
        %297 = vmatpush1.msra.mxu0 %v255
        %298 = vmatprep.subr.mxu0 0.0
        %299 = vmatpush1.msra.mxu0 %v256
        %300 = vmatprep.subr.mxu0 0.0
        %301 = vmatpush1.msra.mxu0 %v257
        %302 = vmatprep.subr.mxu0 0.0
        %303 = vmatpush1.msra.mxu0 %v258
        %304 = vmatprep.subr.mxu0 0.0
        %305 = vmatpush1.msra.mxu0 %v259
        %306 = vmatprep.subr.mxu0 0.0
        %307 = vmatpush1.msra.mxu0 %v260
        %308 = vmatprep.subr.mxu0 0.0
        %309 = vmatpush1.msra.mxu0 %v261
        %310 = vmatprep.subr.mxu0 0.0
        %311 = vmatpush1.msra.mxu0 %v262
        %312 = vmatprep.subr.mxu0 0.0
        %313 = vmatpush1.msra.mxu0 %v263
        %314 = vmatprep.subr.mxu0 0.0
        %315 = vmatpush1.msra.mxu0 %v264
        %316 = vmatprep.subr.mxu0 0.0
        %317 = vmatpush1.msra.mxu0 %v265
        %318 = vmatprep.subr.mxu0 0.0
        %319 = vmatpush1.msra.mxu0 %v266
        %320 = vmatprep.subr.mxu0 0.0
        %321 = vmatpush1.msra.mxu0 %v267
        %322 = vmatprep.subr.mxu0 0.0
        %323 = vmatpush1.msra.mxu0 %v268
        %324 = vmatprep.subr.mxu0 0.0
        %325 = vmatpush1.msra.mxu0 %v269
        %326 = vmatprep.subr.mxu0 0.0
        %327 = vmatpush1.msra.mxu0 %v270
        %328 = vmatprep.subr.mxu0 0.0
        %329 = vmatpush1.msra.mxu0 %v271
        %330 = vmatprep.subr.mxu0 0.0
        %331 = vmatpush1.msra.mxu0 %v272
        %332 = vmatprep.subr.mxu0 0.0
        %333 = vmatpush1.msra.mxu0 %v273
        %334 = vmatprep.subr.mxu0 0.0
        %335 = vmatpush1.msra.mxu0 %v274
        %336 = vmatprep.subr.mxu0 0.0
        %337 = vmatpush1.msra.mxu0 %v275
        %338 = vmatprep.subr.mxu0 0.0
        %339 = vmatpush1.msra.mxu0 %v276
        %340 = vmatprep.subr.mxu0 0.0
        %341 = vmatpush1.msra.mxu0 %v277
        %342 = vmatprep.mubr.f32.mxu0 %v245
        %343 = vmatmul.mubr.f32.gmra.mrb[0].mxu0 %v244
        %v344 = vpop.f32.mrb[0].mxu0
        %v345 = vadd.f32 0.0, %v344
        %v346 = vpop.f32.mrb[0].mxu0
        %347 = vdwg.mxu0
        %v348 = vadd.f32 %v243, %v345
        %349 = vst [vmem:[#allocation2] sm:$0xff] %v348
        %p350 = scmp.eq.s32.totalorder %s26, 2
        // Predicated region
        $region45: #{tpu_custom_call.1} parent=31 // pred_check
          %p351 = pneg %p350
        $region46: #{tpu_custom_call.1} parent=31 // pred_check_branch
          %353 = sbr.rel (%p351) target = $region48
        $region47: #{tpu_custom_call.1} parent=31 // pred_region
          %v354 = vld [vmem:[#allocation2] sm:$0xff]
          %v355 = vld [vmem:[%s2] sm:$0x1]
          %v357 = vlaneseq
          %v358 = vshrl.u32 %v357, 7
          %v359 = vsub.s32 0, %v358
          %v360 = vrot.slane %v355, %v359
          %v362 = vadd.f32 %v354, %v360
          %363 = vst [vmem:[#allocation8] sm:$0xff] %v362
        $region48: #{tpu_custom_call.1} parent=31 // pred_fallthru
          _
        // Predicated region
        $region49: #{tpu_custom_call.1} parent=31 // pred_check
          %p364 = pneg %p126
        $region50: #{tpu_custom_call.1} parent=31 // pred_check_branch
          %366 = sbr.rel (%p364) target = $region52
        $region51: #{tpu_custom_call.1} parent=31 // pred_region
          %s368 = ssub.s32 128, 128
          %369 = vsyncadd [#allocation5], %s368
          %s370 = smul.addr %s25, 128
          %s371 = scalar_lea.hbm %s3, %s370
          %s373 = sshll.u32 [#allocation8], 4
          %s374 = int_to_ptr.vmem [resolvable:$true] %s373
          %376 = dma.vmem_to_hbm [thread:$0]  %s374, 128, %s371, [#allocation5]
        $region52: #{tpu_custom_call.1} parent=31 // pred_fallthru
          _
        // Predicated region
        $region53: #{tpu_custom_call.1} parent=31 // pred_check
          %p377 = pneg %p126
        $region54: #{tpu_custom_call.1} parent=31 // pred_check_branch
          %379 = sbr.rel (%p377) target = $region56
        $region55: #{tpu_custom_call.1} parent=31 // pred_region
          %380 = dma.done [#allocation5], 128
        $region56: #{tpu_custom_call.1} parent=31 // pred_fallthru
          _
      $region32: #{tpu_custom_call.1} parent=5 // pred_fallthru
        _
      %p381 = scmp.le.s32.totalorder 2, %s16
      // Predicated region
      $region57: #{tpu_custom_call.1} parent=5 // pred_check
        %p382 = pneg %p381
      $region58: #{tpu_custom_call.1} parent=5 // pred_check_branch
        %384 = sbr.rel (%p382) target = $region60
      $region59: #{tpu_custom_call.1} parent=5 // pred_region
        %s385 = ssub.s32 %s16, 2
      $region60: #{tpu_custom_call.1} parent=5 // pred_fallthru
        _
    $region6: #{tpu_custom_call.1} parent=1 // loop_footer
      %s20 = sadd.s32 1, %s16
    $region7: #{tpu_custom_call.1} parent=1 // loop_footer_branch
      %15 = sbr.rel target = $region3
    $region8: #{tpu_custom_call.1} parent=1 // loop_exit
      _
    %386 = vsyncpa [#allocation4], 1
    %s387 = scalar_lea.sflag [#allocation4], 1
    %388 = vsyncpa %s387, 1
    %389 = vsyncpa [#allocation7], 1
    %s390 = scalar_lea.sflag [#allocation7], 1
    %391 = vsyncpa %s390, 1
    %392 = vsyncpa [#allocation5], 1
    %s393 = scalar_lea.sflag [#allocation5], 1
    %394 = vsyncpa %s393, 1

</llo_original>
